<compile_context>
chip_gen: v5e
topology: v5e:2x2
jax: 0.10.0
libtpu: 0.0.40
codegen_flags: <defaults>
</compile_context>

<pallas_src>
import math
import functools

import jax
import jax.numpy as jnp
from jax import lax
from jax.experimental import pallas as pl
from jax.experimental.pallas import tpu as pltpu

# ---- module hyper-parameters (small, synthetic) -----------------------------
D_MODEL = 32
HEADS = 4
D_FF = 64
EPS = 1e-6
DROPOUT_RATE = 0.1   # identity in eval-mode forward
NEG_INF = -1e9


def _layer_norm(x, gamma, beta, eps):
    mu = jnp.mean(x, axis=-1, keepdims=True)
    var = jnp.mean((x - mu) ** 2, axis=-1, keepdims=True)
    return (x - mu) * lax.rsqrt(var + eps) * gamma + beta


def encoder_layer_kernel(*refs, heads, eps, has_bias):
    if has_bias:
        x_ref, bias_ref, wqkv_ref, wo_ref, w1_ref, w2_ref, vec_ref, o_ref = refs
    else:
        x_ref, wqkv_ref, wo_ref, w1_ref, w2_ref, vec_ref, o_ref = refs
        bias_ref = None

    R, D = x_ref.shape
    d_ff = w1_ref.shape[1]
    dh = D // heads

    x = x_ref[...]                                   # (R, D) f32
    xb = x.astype(jnp.bfloat16)

    # --- packed bias / LayerNorm slab: one (8, 128) f32 tile ------------------
    bqkv = vec_ref[0:1, : 3 * D]                     # Q part already scaled
    bo   = vec_ref[1:2, :D]
    ln1g = vec_ref[2:3, :D]
    ln1b = vec_ref[3:4, :D]
    b1   = vec_ref[4:5, :d_ff]
    b2   = vec_ref[5:6, :D]
    ln2g = vec_ref[6:7, :D]
    ln2b = vec_ref[7:8, :D]

    # --- fused QKV projection: one wide MXU dot -------------------------------
    qkv = jnp.dot(xb, wqkv_ref[...], preferred_element_type=jnp.float32) + bqkv
    q = qkv[:, 0:D].astype(jnp.bfloat16)             # 1/sqrt(dh) folded in
    k = qkv[:, D:2 * D].astype(jnp.bfloat16)
    v = qkv[:, 2 * D:3 * D].astype(jnp.bfloat16)

    # --- head-batched attention over ALL rows (R = B*S) -----------------------
    # Cross-batch pairs are killed by the additive bias (block-diagonal), so no
    # per-batch loop, no sublane concat, and a single pair of batched dots.
    qh = jnp.stack([q[:, h * dh:(h + 1) * dh] for h in range(heads)], axis=0)  # (H,R,dh)
    kh = jnp.stack([k[:, h * dh:(h + 1) * dh] for h in range(heads)], axis=0)
    vh = jnp.stack([v[:, h * dh:(h + 1) * dh] for h in range(heads)], axis=0)

    scores = jnp.einsum("hqd,hkd->hqk", qh, kh,
                        preferred_element_type=jnp.float32)       # (H, R, R) f32
    if has_bias:
        scores = scores + bias_ref[...]                           # (R, R) bcast over H

    m = jnp.max(scores, axis=-1, keepdims=True)
    p = jnp.exp(scores - m)
    p = p * pl.reciprocal(jnp.sum(p, axis=-1, keepdims=True), approx=True)

    ctx = jnp.einsum("hqk,hkd->hqd", p.astype(jnp.bfloat16), vh,
                     preferred_element_type=jnp.float32)          # (H, R, dh)
    ctx_flat = jnp.concatenate([ctx[h] for h in range(heads)], axis=1)   # (R, D)

    attn = jnp.dot(ctx_flat.astype(jnp.bfloat16), wo_ref[...],
                   preferred_element_type=jnp.float32) + bo       # (R, D) f32

    # --- residual 1: LayerNorm(x + attn)   (dropout = identity) ---------------
    h1 = _layer_norm(x + attn, ln1g, ln1b, eps)

    # --- position-wise feed-forward (ReLU) -------------------------------------
    f = jnp.dot(h1.astype(jnp.bfloat16), w1_ref[...],
                preferred_element_type=jnp.float32) + b1
    f = jnp.maximum(f, 0.0)
    f = jnp.dot(f.astype(jnp.bfloat16), w2_ref[...],
                preferred_element_type=jnp.float32) + b2

    # --- residual 2: LayerNorm(h1 + ffn) ---------------------------------------
    out = _layer_norm(h1 + f, ln2g, ln2b, eps)                    # (R, D) f32

    # --- store: lane-dense (rg, 128) slab when possible ------------------------
    oc = o_ref.shape[1]
    if oc == D:
        o_ref[...] = out.astype(o_ref.dtype)
    else:
        g = oc // D
        rg = R // g
        dense = jnp.concatenate([out[i * rg:(i + 1) * rg, :] for i in range(g)],
                                axis=1)                           # (rg, 128)
        o_ref[...] = dense.astype(o_ref.dtype)


def prepare_encoder_params(params, *, heads=HEADS):
    """One-time weight prep (fused QKV, folded scale, bf16 casts, packed slab).

    Hoisted out of the per-call path so these XLA ops don't rival the kernel's
    own runtime on every invocation."""
    d_model = params["wq"].shape[0]
    d_ff = params["w1"].shape[1]
    assert d_model % heads == 0
    scale = 1.0 / math.sqrt(d_model // heads)

    wqkv = jnp.concatenate([params["wq"] * scale, params["wk"], params["wv"]],
                           axis=1).astype(jnp.bfloat16)                    # (D, 3D)
    bqkv = jnp.concatenate([params["bq"] * scale, params["bk"], params["bv"]],
                           axis=1).astype(jnp.float32)                     # (1, 3D)

    # pack all small bias / LayerNorm vectors into one (8, W) f32 tile, W % 128 == 0
    W = max(128, pl.cdiv(max(3 * d_model, d_ff), 128) * 128)

    def row(vv):
        vv = jnp.asarray(vv, jnp.float32).reshape(-1)
        return jnp.pad(vv, (0, W - vv.shape[0]))

    vec = jnp.stack([
        row(bqkv), row(params["bo"]),
        row(params["ln1_g"]), row(params["ln1_b"]),
        row(params["b1"]), row(params["b2"]),
        row(params["ln2_g"]), row(params["ln2_b"]),
    ], axis=0)                                                             # (8, W) f32

    return dict(
        wqkv=wqkv,
        wo=params["wo"].astype(jnp.bfloat16),
        w1=params["w1"].astype(jnp.bfloat16),
        w2=params["w2"].astype(jnp.bfloat16),
        vec=vec,
        heads=heads, d_model=d_model, d_ff=d_ff,
    )


def encoder_layer(x, mask, prep, *, eps=EPS):
    B, S, D = x.shape
    heads, d_ff = prep["heads"], prep["d_ff"]
    assert D == prep["d_model"]
    R = B * S
    dh = D // heads

    # Additive attention bias (R, R): folds the user mask AND the cross-batch
    # block structure so the kernel can process all B*S rows in one batched pass.
    # Fast path: no bias input at all when mask is None and B == 1.
    use_bias = (mask is not None) or (B > 1)
    inputs = [x.reshape(R, D)]
    if use_bias:
        if mask is not None:
            blocks = jnp.zeros((B, S, B, S), jnp.float32)
            blocks = blocks.at[jnp.arange(B), :, jnp.arange(B), :].set(
                jnp.asarray(mask, jnp.float32))
            allow = blocks.reshape(R, R) > 0
        else:
            rb = jnp.repeat(jnp.arange(B), S)
            allow = rb[:, None] == rb[None, :]
        bias = jnp.where(allow, 0.0, NEG_INF).astype(jnp.float32)          # (R, R)
        inputs.append(bias)
    inputs += [prep["wqkv"], prep["wo"], prep["w1"], prep["w2"], prep["vec"]]

    # Lane-dense output slab: (R/G, G*D == 128) when D divides 128.
    if D <= 128 and 128 % D == 0 and R % (128 // D) == 0:
        G = 128 // D
        out_shape2d = (R // G, 128)
    else:
        G = 1
        out_shape2d = (R, D)   # TODO(synk): lane-dense packing for general D

    def full_spec(a):
        nd = a.ndim
        return pl.BlockSpec(a.shape, lambda i, _nd=nd: (0,) * _nd)

    flops = (2 * R * D * 3 * D                  # fused QKV
             + 2 * heads * R * R * dh * 2       # scores + p@v
             + 2 * R * D * D                    # Wo
             + 2 * R * D * d_ff * 2)            # FFN
    bytes_accessed = (4 * R * D * 2
                      + 2 * (prep["wqkv"].size + prep["wo"].size
                             + prep["w1"].size + prep["w2"].size)
                      + 4 * prep["vec"].size
                      + (4 * R * R if use_bias else 0))
    cost = pl.CostEstimate(flops=int(flops),
                           transcendentals=int(heads * R * R),
                           bytes_accessed=int(bytes_accessed))

    kernel = functools.partial(encoder_layer_kernel, heads=heads, eps=eps,
                               has_bias=use_bias)
    out2d = pl.pallas_call(
        kernel,
        out_shape=jax.ShapeDtypeStruct(out_shape2d, x.dtype),
        grid=(1,),                          # single step: no serial-grid overhead
        in_specs=[full_spec(a) for a in inputs],
        out_specs=pl.BlockSpec(out_shape2d, lambda i: (0, 0)),
        compiler_params=pltpu.CompilerParams(dimension_semantics=("arbitrary",)),
        cost_estimate=cost,
    )(*inputs)

    if G > 1:
        rg = R // G
        out2d = out2d.reshape(rg, G, D).transpose(1, 0, 2).reshape(R, D)
    return out2d.reshape(B, S, D)


# ---- pure-JAX f32 reference (same math) for a sanity check -------------------
def encoder_layer_ref(x, mask, params, *, heads=HEADS, eps=EPS):
    B, S, D = x.shape
    dh = D // heads
    q = x @ params["wq"] + params["bq"]
    k = x @ params["wk"] + params["bk"]
    v = x @ params["wv"] + params["bv"]
    q = q.reshape(B, S, heads, dh).transpose(0, 2, 1, 3)
    k = k.reshape(B, S, heads, dh).transpose(0, 2, 1, 3)
    v = v.reshape(B, S, heads, dh).transpose(0, 2, 1, 3)
    scores = jnp.einsum("bhqd,bhkd->bhqk", q, k) / math.sqrt(dh)
    if mask is not None:
        scores = jnp.where(mask[:, None, :, :] > 0, scores, NEG_INF)
    p = jax.nn.softmax(scores, axis=-1)
    attn = jnp.einsum("bhqk,bhkd->bhqd", p, v).transpose(0, 2, 1, 3).reshape(B, S, D)
    attn = attn @ params["wo"] + params["bo"]

    def ln(z, g, b):
        mu = jnp.mean(z, axis=-1, keepdims=True)
        var = jnp.mean((z - mu) ** 2, axis=-1, keepdims=True)
        return (z - mu) * lax.rsqrt(var + eps) * g + b

    h1 = ln(x + attn, params["ln1_g"], params["ln1_b"])
    f = jnp.maximum(h1 @ params["w1"] + params["b1"], 0.0) @ params["w2"] + params["b2"]
    return ln(h1 + f, params["ln2_g"], params["ln2_b"])


def init_params(key, d_model=D_MODEL, d_ff=D_FF):
    ks = jax.random.split(key, 8)
    s = 0.02

    def w(k, shape):
        return (s * jax.random.normal(k, shape)).astype(jnp.float32)

    return {
        "wq": w(ks[0], (d_model, d_model)), "bq": jnp.zeros((1, d_model), jnp.float32),
        "wk": w(ks[1], (d_model, d_model)), "bk": jnp.zeros((1, d_model), jnp.float32),
        "wv": w(ks[2], (d_model, d_model)), "bv": jnp.zeros((1, d_model), jnp.float32),
        "wo": w(ks[3], (d_model, d_model)), "bo": jnp.zeros((1, d_model), jnp.float32),
        "ln1_g": jnp.ones((1, d_model), jnp.float32), "ln1_b": jnp.zeros((1, d_model), jnp.float32),
        "w1": w(ks[4], (d_model, d_ff)), "b1": jnp.zeros((1, d_ff), jnp.float32),
        "w2": w(ks[5], (d_ff, d_model)), "b2": jnp.zeros((1, d_model), jnp.float32),
        "ln2_g": jnp.ones((1, d_model), jnp.float32), "ln2_b": jnp.zeros((1, d_model), jnp.float32),
    }


if __name__ == "__main__":
    B, S = 2, 8
    key = jax.random.PRNGKey(0)
    kx, kp = jax.random.split(key)

    x = jax.random.normal(kx, (B, S, D_MODEL), dtype=jnp.float32)
    causal = jnp.tril(jnp.ones((S, S), jnp.float32))
    mask = jnp.broadcast_to(causal, (B, S, S))
    params = init_params(kp)
    prep = prepare_encoder_params(params)        # one-time weight prep (hoisted)

    # masked path
    out = jax.block_until_ready(encoder_layer(x, mask, prep))
    ref = encoder_layer_ref(x, mask, params)
    assert out.shape == (B, S, D_MODEL)
    assert jnp.allclose(out, ref, rtol=2e-3, atol=2e-3), "mismatch vs reference (masked path)"

    # compile-time fast path: no mask/bias input at all (B=1, mask=None)
    x1 = x[:1]
    out1 = jax.block_until_ready(encoder_layer(x1, None, prep))
    ref1 = encoder_layer_ref(x1, None, params)
    assert jnp.allclose(out1, ref1, rtol=2e-3, atol=2e-3), "mismatch vs reference (no-mask path)"

    print("KERNEL_OK")
</pallas_src>

<mosaic_0001>
module attributes {stable_mosaic.version = 11 : i64} {
  func.func @encoder_layer_kernel(%arg0: i32, %arg1: memref<16x32xf32, #tpu.memory_space<vmem>>, %arg2: memref<16x16xf32, #tpu.memory_space<vmem>>, %arg3: memref<32x96xbf16, #tpu.memory_space<vmem>>, %arg4: memref<32x32xbf16, #tpu.memory_space<vmem>>, %arg5: memref<32x64xbf16, #tpu.memory_space<vmem>>, %arg6: memref<64x32xbf16, #tpu.memory_space<vmem>>, %arg7: memref<8x128xf32, #tpu.memory_space<vmem>>, %arg8: memref<4x128xf32, #tpu.memory_space<vmem>>) attributes {dimension_semantics = [#tpu.dimension_semantics<arbitrary>], iteration_bounds = array<i64: 1>, scalar_prefetch = 0 : i64, scratch_operands = 0 : i64, tpu.core_type = #tpu.core_type<tc>, window_params = [{pipeline_mode = #tpu.pipeline_mode<synchronous>, transform_indices = @transform_0, window_bounds = array<i64: 16, 32>}, {pipeline_mode = #tpu.pipeline_mode<synchronous>, transform_indices = @transform_1, window_bounds = array<i64: 16, 16>}, {pipeline_mode = #tpu.pipeline_mode<synchronous>, transform_indices = @transform_2, window_bounds = array<i64: 32, 96>}, {pipeline_mode = #tpu.pipeline_mode<synchronous>, transform_indices = @transform_3, window_bounds = array<i64: 32, 32>}, {pipeline_mode = #tpu.pipeline_mode<synchronous>, transform_indices = @transform_4, window_bounds = array<i64: 32, 64>}, {pipeline_mode = #tpu.pipeline_mode<synchronous>, transform_indices = @transform_5, window_bounds = array<i64: 64, 32>}, {pipeline_mode = #tpu.pipeline_mode<synchronous>, transform_indices = @transform_6, window_bounds = array<i64: 8, 128>}, {pipeline_mode = #tpu.pipeline_mode<synchronous>, transform_indices = @transform_7, window_bounds = array<i64: 4, 128>}]} {
    %c0 = arith.constant 0 : index
    %c0_0 = arith.constant 0 : index
    %0 = vector.load %arg1[%c0, %c0_0] : memref<16x32xf32, #tpu.memory_space<vmem>>, vector<16x32xf32>
    %1 = arith.truncf %0 : vector<16x32xf32> to vector<16x32xbf16>
    %c0_1 = arith.constant 0 : index
    %c0_2 = arith.constant 0 : index
    %2 = vector.load %arg7[%c0_1, %c0_2] : memref<8x128xf32, #tpu.memory_space<vmem>>, vector<1x96xf32>
    %c1 = arith.constant 1 : index
    %c0_3 = arith.constant 0 : index
    %3 = vector.load %arg7[%c1, %c0_3] : memref<8x128xf32, #tpu.memory_space<vmem>>, vector<1x32xf32>
    %c2 = arith.constant 2 : index
    %c0_4 = arith.constant 0 : index
    %4 = vector.load %arg7[%c2, %c0_4] : memref<8x128xf32, #tpu.memory_space<vmem>>, vector<1x32xf32>
    %c3 = arith.constant 3 : index
    %c0_5 = arith.constant 0 : index
    %5 = vector.load %arg7[%c3, %c0_5] : memref<8x128xf32, #tpu.memory_space<vmem>>, vector<1x32xf32>
    %c4 = arith.constant 4 : index
    %c0_6 = arith.constant 0 : index
    %6 = vector.load %arg7[%c4, %c0_6] : memref<8x128xf32, #tpu.memory_space<vmem>>, vector<1x64xf32>
    %c5 = arith.constant 5 : index
    %c0_7 = arith.constant 0 : index
    %7 = vector.load %arg7[%c5, %c0_7] : memref<8x128xf32, #tpu.memory_space<vmem>>, vector<1x32xf32>
    %c6 = arith.constant 6 : index
    %c0_8 = arith.constant 0 : index
    %8 = vector.load %arg7[%c6, %c0_8] : memref<8x128xf32, #tpu.memory_space<vmem>>, vector<1x32xf32>
    %c7 = arith.constant 7 : index
    %c0_9 = arith.constant 0 : index
    %9 = vector.load %arg7[%c7, %c0_9] : memref<8x128xf32, #tpu.memory_space<vmem>>, vector<1x32xf32>
    %c0_10 = arith.constant 0 : index
    %c0_11 = arith.constant 0 : index
    %10 = vector.load %arg3[%c0_10, %c0_11] : memref<32x96xbf16, #tpu.memory_space<vmem>>, vector<32x96xbf16>
    %cst = arith.constant dense<0.000000e+00> : vector<16x96xf32>
    %11 = tpu.matmul %1, %10, %cst {dimension_numbers = #tpu.dot_dimension_numbers<[1], [0], [0], [1], [0, 0, 1, 1], [], []>} : vector<16x32xbf16>, vector<32x96xbf16>, vector<16x96xf32> -> vector<16x96xf32>
    %12 = vector.broadcast %2 : vector<1x96xf32> to vector<16x96xf32>
    %13 = arith.addf %11, %12 : vector<16x96xf32>
    %14 = vector.extract_strided_slice %13 {offsets = [0, 0], sizes = [16, 32], strides = [1, 1]} : vector<16x96xf32> to vector<16x32xf32>
    %15 = arith.truncf %14 : vector<16x32xf32> to vector<16x32xbf16>
    %16 = vector.extract_strided_slice %13 {offsets = [0, 32], sizes = [16, 32], strides = [1, 1]} : vector<16x96xf32> to vector<16x32xf32>
    %17 = arith.truncf %16 : vector<16x32xf32> to vector<16x32xbf16>
    %18 = vector.extract_strided_slice %13 {offsets = [0, 64], sizes = [16, 32], strides = [1, 1]} : vector<16x96xf32> to vector<16x32xf32>
    %19 = arith.truncf %18 : vector<16x32xf32> to vector<16x32xbf16>
    %20 = vector.extract_strided_slice %15 {offsets = [0, 0], sizes = [16, 8], strides = [1, 1]} : vector<16x32xbf16> to vector<16x8xbf16>
    %21 = vector.extract_strided_slice %15 {offsets = [0, 8], sizes = [16, 8], strides = [1, 1]} : vector<16x32xbf16> to vector<16x8xbf16>
    %22 = vector.extract_strided_slice %15 {offsets = [0, 16], sizes = [16, 8], strides = [1, 1]} : vector<16x32xbf16> to vector<16x8xbf16>
    %23 = vector.extract_strided_slice %15 {offsets = [0, 24], sizes = [16, 8], strides = [1, 1]} : vector<16x32xbf16> to vector<16x8xbf16>
    %24 = vector.shape_cast %20 : vector<16x8xbf16> to vector<1x16x8xbf16>
    %25 = vector.shape_cast %21 : vector<16x8xbf16> to vector<1x16x8xbf16>
    %26 = vector.shape_cast %22 : vector<16x8xbf16> to vector<1x16x8xbf16>
    %27 = vector.shape_cast %23 : vector<16x8xbf16> to vector<1x16x8xbf16>
    %28 = tpu.concatenate %24, %25, %26, %27 in 0 : vector<1x16x8xbf16>, vector<1x16x8xbf16>, vector<1x16x8xbf16>, vector<1x16x8xbf16> -> vector<4x16x8xbf16>
    %29 = vector.extract_strided_slice %17 {offsets = [0, 0], sizes = [16, 8], strides = [1, 1]} : vector<16x32xbf16> to vector<16x8xbf16>
    %30 = vector.extract_strided_slice %17 {offsets = [0, 8], sizes = [16, 8], strides = [1, 1]} : vector<16x32xbf16> to vector<16x8xbf16>
    %31 = vector.extract_strided_slice %17 {offsets = [0, 16], sizes = [16, 8], strides = [1, 1]} : vector<16x32xbf16> to vector<16x8xbf16>
    %32 = vector.extract_strided_slice %17 {offsets = [0, 24], sizes = [16, 8], strides = [1, 1]} : vector<16x32xbf16> to vector<16x8xbf16>
    %33 = vector.shape_cast %29 : vector<16x8xbf16> to vector<1x16x8xbf16>
    %34 = vector.shape_cast %30 : vector<16x8xbf16> to vector<1x16x8xbf16>
    %35 = vector.shape_cast %31 : vector<16x8xbf16> to vector<1x16x8xbf16>
    %36 = vector.shape_cast %32 : vector<16x8xbf16> to vector<1x16x8xbf16>
    %37 = tpu.concatenate %33, %34, %35, %36 in 0 : vector<1x16x8xbf16>, vector<1x16x8xbf16>, vector<1x16x8xbf16>, vector<1x16x8xbf16> -> vector<4x16x8xbf16>
    %38 = vector.extract_strided_slice %19 {offsets = [0, 0], sizes = [16, 8], strides = [1, 1]} : vector<16x32xbf16> to vector<16x8xbf16>
    %39 = vector.extract_strided_slice %19 {offsets = [0, 8], sizes = [16, 8], strides = [1, 1]} : vector<16x32xbf16> to vector<16x8xbf16>
    %40 = vector.extract_strided_slice %19 {offsets = [0, 16], sizes = [16, 8], strides = [1, 1]} : vector<16x32xbf16> to vector<16x8xbf16>
    %41 = vector.extract_strided_slice %19 {offsets = [0, 24], sizes = [16, 8], strides = [1, 1]} : vector<16x32xbf16> to vector<16x8xbf16>
    %42 = vector.shape_cast %38 : vector<16x8xbf16> to vector<1x16x8xbf16>
    %43 = vector.shape_cast %39 : vector<16x8xbf16> to vector<1x16x8xbf16>
    %44 = vector.shape_cast %40 : vector<16x8xbf16> to vector<1x16x8xbf16>
    %45 = vector.shape_cast %41 : vector<16x8xbf16> to vector<1x16x8xbf16>
    %46 = tpu.concatenate %42, %43, %44, %45 in 0 : vector<1x16x8xbf16>, vector<1x16x8xbf16>, vector<1x16x8xbf16>, vector<1x16x8xbf16> -> vector<4x16x8xbf16>
    "tpu.trace_start"() <{level = 10 : i32, message = "hqd,hkd->hqk"}> : () -> ()
    %cst_12 = arith.constant dense<0.000000e+00> : vector<4x16x16xf32>
    %47 = tpu.matmul %28, %37, %cst_12 {dimension_numbers = #tpu.dot_dimension_numbers<[2], [2], [1], [1], [0, 0, 0, 1, 1, 1], [0], [0]>} : vector<4x16x8xbf16>, vector<4x16x8xbf16>, vector<4x16x16xf32> -> vector<4x16x16xf32>
    "tpu.trace_stop"() : () -> ()
    %c0_13 = arith.constant 0 : index
    %c0_14 = arith.constant 0 : index
    %48 = vector.load %arg2[%c0_13, %c0_14] : memref<16x16xf32, #tpu.memory_space<vmem>>, vector<16x16xf32>
    %49 = vector.shape_cast %48 : vector<16x16xf32> to vector<1x16x16xf32>
    %50 = vector.broadcast %49 : vector<1x16x16xf32> to vector<4x16x16xf32>
    %51 = arith.addf %47, %50 : vector<4x16x16xf32>
    %cst_15 = arith.constant dense<0xFF800000> : vector<4x16xf32>
    %52 = vector.multi_reduction <maximumf>, %51, %cst_15 [2] : vector<4x16x16xf32> to vector<4x16xf32>
    %53 = vector.shape_cast %52 : vector<4x16xf32> to vector<4x16x1xf32>
    %54 = vector.broadcast %53 : vector<4x16x1xf32> to vector<4x16x16xf32>
    %55 = arith.subf %51, %54 : vector<4x16x16xf32>
    %56 = math.exp %55 : vector<4x16x16xf32>
    %cst_16 = arith.constant dense<0.000000e+00> : vector<4x16xf32>
    %57 = vector.multi_reduction <add>, %56, %cst_16 [2] : vector<4x16x16xf32> to vector<4x16xf32>
    %58 = vector.shape_cast %57 : vector<4x16xf32> to vector<4x16x1xf32>
    %59 = tpu.reciprocal %58 {approx = true} : vector<4x16x1xf32> -> vector<4x16x1xf32>
    %60 = vector.broadcast %59 : vector<4x16x1xf32> to vector<4x16x16xf32>
    %61 = arith.mulf %56, %60 : vector<4x16x16xf32>
    %62 = arith.truncf %61 : vector<4x16x16xf32> to vector<4x16x16xbf16>
    "tpu.trace_start"() <{level = 10 : i32, message = "hqk,hkd->hqd"}> : () -> ()
    %cst_17 = arith.constant dense<0.000000e+00> : vector<4x16x8xf32>
    %63 = tpu.matmul %62, %46, %cst_17 {dimension_numbers = #tpu.dot_dimension_numbers<[2], [1], [1], [2], [0, 0, 0, 1, 1, 2], [0], [0]>} : vector<4x16x16xbf16>, vector<4x16x8xbf16>, vector<4x16x8xf32> -> vector<4x16x8xf32>
    "tpu.trace_stop"() : () -> ()
    %64 = vector.extract_strided_slice %63 {offsets = [0, 0, 0], sizes = [1, 16, 8], strides = [1, 1, 1]} : vector<4x16x8xf32> to vector<1x16x8xf32>
    %65 = vector.shape_cast %64 : vector<1x16x8xf32> to vector<16x8xf32>
    %66 = vector.extract_strided_slice %63 {offsets = [1, 0, 0], sizes = [1, 16, 8], strides = [1, 1, 1]} : vector<4x16x8xf32> to vector<1x16x8xf32>
    %67 = vector.shape_cast %66 : vector<1x16x8xf32> to vector<16x8xf32>
    %68 = vector.extract_strided_slice %63 {offsets = [2, 0, 0], sizes = [1, 16, 8], strides = [1, 1, 1]} : vector<4x16x8xf32> to vector<1x16x8xf32>
    %69 = vector.shape_cast %68 : vector<1x16x8xf32> to vector<16x8xf32>
    %70 = vector.extract_strided_slice %63 {offsets = [3, 0, 0], sizes = [1, 16, 8], strides = [1, 1, 1]} : vector<4x16x8xf32> to vector<1x16x8xf32>
    %71 = vector.shape_cast %70 : vector<1x16x8xf32> to vector<16x8xf32>
    %72 = tpu.concatenate %65, %67, %69, %71 in 1 : vector<16x8xf32>, vector<16x8xf32>, vector<16x8xf32>, vector<16x8xf32> -> vector<16x32xf32>
    %73 = arith.truncf %72 : vector<16x32xf32> to vector<16x32xbf16>
    %c0_18 = arith.constant 0 : index
    %c0_19 = arith.constant 0 : index
    %74 = vector.load %arg4[%c0_18, %c0_19] : memref<32x32xbf16, #tpu.memory_space<vmem>>, vector<32x32xbf16>
    %cst_20 = arith.constant dense<0.000000e+00> : vector<16x32xf32>
    %75 = tpu.matmul %73, %74, %cst_20 {dimension_numbers = #tpu.dot_dimension_numbers<[1], [0], [0], [1], [0, 0, 1, 1], [], []>} : vector<16x32xbf16>, vector<32x32xbf16>, vector<16x32xf32> -> vector<16x32xf32>
    %76 = vector.broadcast %3 : vector<1x32xf32> to vector<16x32xf32>
    %77 = arith.addf %75, %76 : vector<16x32xf32>
    %78 = arith.addf %0, %77 : vector<16x32xf32>
    %cst_21 = arith.constant dense<0.000000e+00> : vector<16xf32>
    %79 = vector.multi_reduction <add>, %78, %cst_21 [1] : vector<16x32xf32> to vector<16xf32>
    %80 = vector.shape_cast %79 : vector<16xf32> to vector<16x1xf32>
    %cst_22 = arith.constant 3.200000e+01 : f32
    %81 = vector.broadcast %cst_22 : f32 to vector<16x1xf32>
    %82 = arith.divf %80, %81 : vector<16x1xf32>
    %83 = vector.broadcast %82 : vector<16x1xf32> to vector<16x32xf32>
    %84 = arith.subf %78, %83 : vector<16x32xf32>
    %85 = arith.mulf %84, %84 : vector<16x32xf32>
    %cst_23 = arith.constant dense<0.000000e+00> : vector<16xf32>
    %86 = vector.multi_reduction <add>, %85, %cst_23 [1] : vector<16x32xf32> to vector<16xf32>
    %87 = vector.shape_cast %86 : vector<16xf32> to vector<16x1xf32>
    %cst_24 = arith.constant 3.200000e+01 : f32
    %88 = vector.broadcast %cst_24 : f32 to vector<16x1xf32>
    %89 = arith.divf %87, %88 : vector<16x1xf32>
    %90 = vector.broadcast %82 : vector<16x1xf32> to vector<16x32xf32>
    %91 = arith.subf %78, %90 : vector<16x32xf32>
    %cst_25 = arith.constant 9.99999997E-7 : f32
    %92 = vector.broadcast %cst_25 : f32 to vector<16x1xf32>
    %93 = arith.addf %89, %92 : vector<16x1xf32>
    %94 = math.rsqrt %93 : vector<16x1xf32>
    %95 = vector.broadcast %94 : vector<16x1xf32> to vector<16x32xf32>
    %96 = arith.mulf %91, %95 : vector<16x32xf32>
    %97 = vector.broadcast %4 : vector<1x32xf32> to vector<16x32xf32>
    %98 = arith.mulf %96, %97 : vector<16x32xf32>
    %99 = vector.broadcast %5 : vector<1x32xf32> to vector<16x32xf32>
    %100 = arith.addf %98, %99 : vector<16x32xf32>
    %101 = arith.truncf %100 : vector<16x32xf32> to vector<16x32xbf16>
    %c0_26 = arith.constant 0 : index
    %c0_27 = arith.constant 0 : index
    %102 = vector.load %arg5[%c0_26, %c0_27] : memref<32x64xbf16, #tpu.memory_space<vmem>>, vector<32x64xbf16>
    %cst_28 = arith.constant dense<0.000000e+00> : vector<16x64xf32>
    %103 = tpu.matmul %101, %102, %cst_28 {dimension_numbers = #tpu.dot_dimension_numbers<[1], [0], [0], [1], [0, 0, 1, 1], [], []>} : vector<16x32xbf16>, vector<32x64xbf16>, vector<16x64xf32> -> vector<16x64xf32>
    %104 = vector.broadcast %6 : vector<1x64xf32> to vector<16x64xf32>
    %105 = arith.addf %103, %104 : vector<16x64xf32>
    %cst_29 = arith.constant 0.000000e+00 : f32
    %106 = vector.broadcast %cst_29 : f32 to vector<16x64xf32>
    %107 = arith.maximumf %105, %106 : vector<16x64xf32>
    %108 = arith.truncf %107 : vector<16x64xf32> to vector<16x64xbf16>
    %c0_30 = arith.constant 0 : index
    %c0_31 = arith.constant 0 : index
    %109 = vector.load %arg6[%c0_30, %c0_31] : memref<64x32xbf16, #tpu.memory_space<vmem>>, vector<64x32xbf16>
    %cst_32 = arith.constant dense<0.000000e+00> : vector<16x32xf32>
    %110 = tpu.matmul %108, %109, %cst_32 {dimension_numbers = #tpu.dot_dimension_numbers<[1], [0], [0], [1], [0, 0, 1, 1], [], []>} : vector<16x64xbf16>, vector<64x32xbf16>, vector<16x32xf32> -> vector<16x32xf32>
    %111 = vector.broadcast %7 : vector<1x32xf32> to vector<16x32xf32>
    %112 = arith.addf %110, %111 : vector<16x32xf32>
    %113 = arith.addf %100, %112 : vector<16x32xf32>
    %cst_33 = arith.constant dense<0.000000e+00> : vector<16xf32>
    %114 = vector.multi_reduction <add>, %113, %cst_33 [1] : vector<16x32xf32> to vector<16xf32>
    %115 = vector.shape_cast %114 : vector<16xf32> to vector<16x1xf32>
    %cst_34 = arith.constant 3.200000e+01 : f32
    %116 = vector.broadcast %cst_34 : f32 to vector<16x1xf32>
    %117 = arith.divf %115, %116 : vector<16x1xf32>
    %118 = vector.broadcast %117 : vector<16x1xf32> to vector<16x32xf32>
    %119 = arith.subf %113, %118 : vector<16x32xf32>
    %120 = arith.mulf %119, %119 : vector<16x32xf32>
    %cst_35 = arith.constant dense<0.000000e+00> : vector<16xf32>
    %121 = vector.multi_reduction <add>, %120, %cst_35 [1] : vector<16x32xf32> to vector<16xf32>
    %122 = vector.shape_cast %121 : vector<16xf32> to vector<16x1xf32>
    %cst_36 = arith.constant 3.200000e+01 : f32
    %123 = vector.broadcast %cst_36 : f32 to vector<16x1xf32>
    %124 = arith.divf %122, %123 : vector<16x1xf32>
    %125 = vector.broadcast %117 : vector<16x1xf32> to vector<16x32xf32>
    %126 = arith.subf %113, %125 : vector<16x32xf32>
    %cst_37 = arith.constant 9.99999997E-7 : f32
    %127 = vector.broadcast %cst_37 : f32 to vector<16x1xf32>
    %128 = arith.addf %124, %127 : vector<16x1xf32>
    %129 = math.rsqrt %128 : vector<16x1xf32>
    %130 = vector.broadcast %129 : vector<16x1xf32> to vector<16x32xf32>
    %131 = arith.mulf %126, %130 : vector<16x32xf32>
    %132 = vector.broadcast %8 : vector<1x32xf32> to vector<16x32xf32>
    %133 = arith.mulf %131, %132 : vector<16x32xf32>
    %134 = vector.broadcast %9 : vector<1x32xf32> to vector<16x32xf32>
    %135 = arith.addf %133, %134 : vector<16x32xf32>
    %136 = vector.extract_strided_slice %135 {offsets = [0, 0], sizes = [4, 32], strides = [1, 1]} : vector<16x32xf32> to vector<4x32xf32>
    %137 = vector.extract_strided_slice %135 {offsets = [4, 0], sizes = [4, 32], strides = [1, 1]} : vector<16x32xf32> to vector<4x32xf32>
    %138 = vector.extract_strided_slice %135 {offsets = [8, 0], sizes = [4, 32], strides = [1, 1]} : vector<16x32xf32> to vector<4x32xf32>
    %139 = vector.extract_strided_slice %135 {offsets = [12, 0], sizes = [4, 32], strides = [1, 1]} : vector<16x32xf32> to vector<4x32xf32>
    %140 = tpu.concatenate %136, %137, %138, %139 in 1 : vector<4x32xf32>, vector<4x32xf32>, vector<4x32xf32>, vector<4x32xf32> -> vector<4x128xf32>
    %c0_38 = arith.constant 0 : index
    %c0_39 = arith.constant 0 : index
    %141 = vector.load %arg8[%c0_38, %c0_39] : memref<4x128xf32, #tpu.memory_space<vmem>>, vector<4x128xf32>
    tpu.vector_store %arg8[%c0_38, %c0_39], %140 {strides = array<i32>} : memref<4x128xf32, #tpu.memory_space<vmem>>, vector<4x128xf32>,
    return
  }
  func.func @transform_0(%arg0: i32) -> (i32, i32) {
    %c0_i32 = arith.constant 0 : i32
    %c0_i32_0 = arith.constant 0 : i32
    %c0_i32_1 = arith.constant 0 : i32
    return %c0_i32, %c0_i32_0 : i32, i32
  }
  func.func @transform_1(%arg0: i32) -> (i32, i32) {
    %c0_i32 = arith.constant 0 : i32
    %c0_i32_0 = arith.constant 0 : i32
    %c0_i32_1 = arith.constant 0 : i32
    return %c0_i32, %c0_i32_0 : i32, i32
  }
  func.func @transform_2(%arg0: i32) -> (i32, i32) {
    %c0_i32 = arith.constant 0 : i32
    %c0_i32_0 = arith.constant 0 : i32
    %c0_i32_1 = arith.constant 0 : i32
    return %c0_i32, %c0_i32_0 : i32, i32
  }
  func.func @transform_3(%arg0: i32) -> (i32, i32) {
    %c0_i32 = arith.constant 0 : i32
    %c0_i32_0 = arith.constant 0 : i32
    %c0_i32_1 = arith.constant 0 : i32
    return %c0_i32, %c0_i32_0 : i32, i32
  }
  func.func @transform_4(%arg0: i32) -> (i32, i32) {
    %c0_i32 = arith.constant 0 : i32
    %c0_i32_0 = arith.constant 0 : i32
    %c0_i32_1 = arith.constant 0 : i32
    return %c0_i32, %c0_i32_0 : i32, i32
  }
  func.func @transform_5(%arg0: i32) -> (i32, i32) {
    %c0_i32 = arith.constant 0 : i32
    %c0_i32_0 = arith.constant 0 : i32
    %c0_i32_1 = arith.constant 0 : i32
    return %c0_i32, %c0_i32_0 : i32, i32
  }
  func.func @transform_6(%arg0: i32) -> (i32, i32) {
    %c0_i32 = arith.constant 0 : i32
    %c0_i32_0 = arith.constant 0 : i32
    %c0_i32_1 = arith.constant 0 : i32
    return %c0_i32, %c0_i32_0 : i32, i32
  }
  func.func @transform_7(%arg0: i32) -> (i32, i32) {
    %c0_i32 = arith.constant 0 : i32
    %c0_i32_0 = arith.constant 0 : i32
    %c0_i32_1 = arith.constant 0 : i32
    return %c0_i32, %c0_i32_0 : i32, i32
  }
}

</mosaic_0001>

<llo_original>
// kernel: tpu_custom_call.1
$region0: #{tpu_custom_call.1}
  #allocation0 [shape = 'u32[]', space=smem, size = 0x4, offset = 0x4, fixed_abs, tag = 'smem constant byte address 0x4 - core index']
  #allocation1 [shape = 'u32[72,128]{1,0:T(1,128)}', space=vmem, size = 0x9000, scoped, tag = 'internal scratch']
  %s0 = inlined_call_operand.vmem [shape: f32[16,32], index: 0, kind: input, shape index: {}]
  %s1 = inlined_call_operand.vmem [shape: f32[16,16], index: 1, kind: input, shape index: {}]
  %s2 = inlined_call_operand.vmem [shape: bf16[32,96], index: 2, kind: input, shape index: {}]
  %s3 = inlined_call_operand.hbm [shape: bf16[32,32], index: 3, kind: input, shape index: {}]
  %s4 = inlined_call_operand.hbm [shape: bf16[32,64], index: 4, kind: input, shape index: {}]
  %s5 = inlined_call_operand.vmem [shape: bf16[64,32], index: 5, kind: input, shape index: {}]
  %s6 = inlined_call_operand.hbm [shape: f32[8,128], index: 6, kind: input, shape index: {}]
  %s7 = inlined_call_operand.hbm [shape: f32[4,128], index: 7, kind: output, shape index: {}]
  %s8 = sld [smem:[#allocation0]]
  $region50: #{tpu_custom_call.1} parent=0
    _
  %s10 = ssub.s32 1, %s8
  %s11 = scalar_select 0, %s10, %s8
  $region1: #{tpu_custom_call.1} parent=0
    #allocation2 [shape = 'u8[8192]{0}', space=vmem, size = 0x2000, scoped, tag = 'input window, operand 3, single buffered']
    #allocation3 [shape = 's32[1]{0}', space=sflag, size = 0x4, scoped, tag = 'scoped memory for tpu_custom_call.1']
    #allocation4 [shape = 's32[1]{0}', space=sflag, size = 0x4, scoped, tag = 'scoped memory for tpu_custom_call.1']
    #allocation5 [shape = 'u8[8192]{0}', space=vmem, size = 0x2000, scoped, tag = 'input window, operand 4, single buffered']
    #allocation6 [shape = 's32[1]{0}', space=sflag, size = 0x4, scoped, tag = 'scoped memory for tpu_custom_call.1']
    #allocation7 [shape = 'u8[4096]{0}', space=vmem, size = 0x1000, scoped, tag = 'input window, operand 6, single buffered']
    #allocation8 [shape = 'u8[2048]{0}', space=vmem, size = 0x800, scoped, tag = 'output window, operand 0, single buffered']
    %12 = vsyncpa [#allocation3], 0
    %13 = vsyncpa [#allocation6], 0
    %14 = vsyncpa [#allocation4], 0
    // Predicated region
    $region2: #{tpu_custom_call.1} parent=1 // pred_check
      _
    $region3: #{tpu_custom_call.1} parent=1 // pred_check_branch
      %16 = sbr.rel (0) target = $region5
    $region4: #{tpu_custom_call.1} parent=1 // pred_region
      _
    $region5: #{tpu_custom_call.1} parent=1 // pred_fallthru
      _
    // Predicated region
    $region6: #{tpu_custom_call.1} parent=1 // pred_check
      _
    $region7: #{tpu_custom_call.1} parent=1 // pred_check_branch
      %18 = sbr.rel (0) target = $region9
    $region8: #{tpu_custom_call.1} parent=1 // pred_region
      _
    $region9: #{tpu_custom_call.1} parent=1 // pred_fallthru
      _
    // Predicated region
    $region10: #{tpu_custom_call.1} parent=1 // pred_check
      _
    $region11: #{tpu_custom_call.1} parent=1 // pred_check_branch
      %20 = sbr.rel (0) target = $region13
    $region12: #{tpu_custom_call.1} parent=1 // pred_region
      _
    $region13: #{tpu_custom_call.1} parent=1 // pred_fallthru
      _
    // Predicated region
    $region14: #{tpu_custom_call.1} parent=1 // pred_check
      _
    $region15: #{tpu_custom_call.1} parent=1 // pred_check_branch
      %22 = sbr.rel (0) target = $region17
    $region16: #{tpu_custom_call.1} parent=1 // pred_region
      %24 = vsyncadd [#allocation3], 0
      %s25 = sshll.u32 %s3, 4
      %s26 = int_to_ptr.hbm [resolvable:$true] %s25
      %s27 = sshll.u32 [#allocation2], 4
      %s28 = int_to_ptr.vmem [resolvable:$true] %s27
      %33 = dma.hbm_to_vmem [thread:$0]  %s26, 256, %s28, [#allocation3], 64, 64, 4
    $region17: #{tpu_custom_call.1} parent=1 // pred_fallthru
      _
    // Predicated region
    $region18: #{tpu_custom_call.1} parent=1 // pred_check
      _
    $region19: #{tpu_custom_call.1} parent=1 // pred_check_branch
      %35 = sbr.rel (0) target = $region21
    $region20: #{tpu_custom_call.1} parent=1 // pred_region
      %37 = vsyncadd [#allocation6], 0
      %s38 = sshll.u32 %s4, 4
      %s39 = int_to_ptr.hbm [resolvable:$true] %s38
      %s40 = sshll.u32 [#allocation5], 4
      %s41 = int_to_ptr.vmem [resolvable:$true] %s40
      %46 = dma.hbm_to_vmem [thread:$0]  %s39, 256, %s41, [#allocation6], 64, 64, 4
    $region21: #{tpu_custom_call.1} parent=1 // pred_fallthru
      _
    // Predicated region
    $region22: #{tpu_custom_call.1} parent=1 // pred_check
      _
    $region23: #{tpu_custom_call.1} parent=1 // pred_check_branch
      %48 = sbr.rel (0) target = $region25
    $region24: #{tpu_custom_call.1} parent=1 // pred_region
      _
    $region25: #{tpu_custom_call.1} parent=1 // pred_fallthru
      _
    // Predicated region
    $region26: #{tpu_custom_call.1} parent=1 // pred_check
      _
    $region27: #{tpu_custom_call.1} parent=1 // pred_check_branch
      %50 = sbr.rel (0) target = $region29
    $region28: #{tpu_custom_call.1} parent=1 // pred_region
      %52 = vsyncadd [#allocation6], 0
      %s54 = sshll.u32 %s6, 4
      %s55 = int_to_ptr.hbm [resolvable:$true] %s54
      %s56 = sshll.u32 [#allocation7], 4
      %s57 = int_to_ptr.vmem [resolvable:$true] %s56
      %59 = dma.hbm_to_vmem [thread:$0]  %s55, 128, %s57, [#allocation6]
    $region29: #{tpu_custom_call.1} parent=1 // pred_fallthru
      _
    // Predicated region
    $region30: #{tpu_custom_call.1} parent=1 // pred_check
      _
    $region31: #{tpu_custom_call.1} parent=1 // pred_check_branch
      %61 = sbr.rel (0) target = $region33
    $region32: #{tpu_custom_call.1} parent=1 // pred_region
      %63 = dma.done [#allocation3], 256
    $region33: #{tpu_custom_call.1} parent=1 // pred_fallthru
      _
    // Predicated region
    $region34: #{tpu_custom_call.1} parent=1 // pred_check
      _
    $region35: #{tpu_custom_call.1} parent=1 // pred_check_branch
      %65 = sbr.rel (0) target = $region37
    $region36: #{tpu_custom_call.1} parent=1 // pred_region
      %67 = dma.done [#allocation6], 256
    $region37: #{tpu_custom_call.1} parent=1 // pred_fallthru
      _
    // Predicated region
    $region38: #{tpu_custom_call.1} parent=1 // pred_check
      _
    $region39: #{tpu_custom_call.1} parent=1 // pred_check_branch
      %69 = sbr.rel (0) target = $region41
    $region40: #{tpu_custom_call.1} parent=1 // pred_region
      %71 = dma.done [#allocation6], 128
    $region41: #{tpu_custom_call.1} parent=1 // pred_fallthru
      _
    %v73 = vld [vmem:[%s0] sm:$0xff]
    %v74 = vld [vmem:[%s0 + $0x8] sm:$0xff]
    %v75 = vpack.c.bf16 %v74, %v73
    %v76 = vld [vmem:[#allocation7] sm:$0x1]
    %v77 = vld [vmem:[#allocation7 + $0x1] sm:$0x1]
    %v78 = vld [vmem:[#allocation7 + $0x2] sm:$0x1]
    %v79 = vld [vmem:[#allocation7 + $0x3] sm:$0x1]
    %v80 = vld [vmem:[#allocation7 + $0x4] sm:$0x1]
    %v81 = vld [vmem:[#allocation7 + $0x5] sm:$0x1]
    %v82 = vld [vmem:[#allocation7 + $0x6] sm:$0x1]
    %v83 = vld [vmem:[#allocation7 + $0x7] sm:$0x1]
    %v84 = vld [vmem:[%s2] sm:$0xf]
    %v85 = vld [vmem:[%s2 + $0x4] sm:$0xf]
    %v86 = vld [vmem:[%s2 + $0x8] sm:$0xf]
    %v87 = vld [vmem:[%s2 + $0xc] sm:$0xf]
    %v88 = vperm.slane %v76, 0
    %v93 = vunpack.c.l.b16 %v84
    %v94 = vunpack.c.l.b16 %v85
    %v95 = vunpack.c.l.b16 %v86
    %v96 = vunpack.c.l.b16 %v87
    %v97 = vpack.c.b16 %v94, %v93
    %v98 = vpack.c.b16 %v96, %v95
    %vm101 = vcmask 261120
    %v103 = vsel %vm101, %v75, 0
    %105 = vmatpush.bf16.msra.mxu0 0
    %106 = vmatpush.bf16.msra.mxu0 0
    %107 = vmatpush.bf16.msra.mxu0 0
    %108 = vmatpush.bf16.msra.mxu0 0
    %109 = vmatpush.bf16.msra.mxu0 0
    %110 = vmatpush.bf16.msra.mxu0 0
    %111 = vmatpush.bf16.msra.mxu0 %v98
    %112 = vmatpush.bf16.msra.mxu0 %v97
    %113 = vmatmul.bf16.gmra.mxu0 %v103
    %v114 = vpop.f32.mrf.mxu0
    %v115 = vadd.f32 %v88, %v114
    %v116 = vpop.f32.mrf.mxu0
    %v117 = vadd.f32 %v88, %v116
    %118 = vdwg.mxu0
    %v119 = vpack.c.bf16 %v115, %v115
    %v120 = vpack.c.bf16 %v117, %v117
    %123 = vrot.lane.b32.xlu0 %v119, 120
    %v124 = vpop.permute.xlu0 %123
    %125 = vrot.lane.b32.xlu0 %v120, 120
    %v126 = vpop.permute.xlu0 %125
    %127 = vrot.lane.b32.xlu0 %v119, 112
    %v128 = vpop.permute.xlu0 %127
    %129 = vrot.lane.b32.xlu0 %v120, 112
    %v130 = vpop.permute.xlu0 %129
    %131 = vrot.lane.b32.xlu0 %v119, 104
    %v132 = vpop.permute.xlu0 %131
    %133 = vrot.lane.b32.xlu0 %v120, 104
    %v134 = vpop.permute.xlu0 %133
    %v135 = vld [vmem:[%s1] sm:$0xff]
    %v136 = vld [vmem:[%s1 + $0x8] sm:$0xff]
    %v137 = vunpack.c.l.b16 %v119
    %v138 = vunpack.c.l.b16 %v120
    %v139 = vpack.c.b16 %v138, %v137
    %140 = vrot.lane.b32.xlu0 %v139, 96
    %v141 = vpop.permute.xlu0 %140
    %vm142 = vcmask 64512
    %v144 = vsel %vm142, %v139, 0
    %v147 = vsel %vm142, %v141, 0
    %149 = vmatpush.bf16.xpose.msra.mxu0 0
    %150 = vmatpush.bf16.xpose.msra.mxu0 0
    %151 = vmatpush.bf16.xpose.msra.mxu0 0
    %152 = vmatpush.bf16.xpose.msra.mxu0 0
    %153 = vmatpush.bf16.xpose.msra.mxu0 0
    %154 = vmatpush.bf16.xpose.msra.mxu0 0
    %155 = vmatpush.bf16.xpose.msra.mxu0 0
    %156 = vmatpush.bf16.xpose.msra.mxu0 %v147
    %157 = vmatmul.bf16.gmra.mxu0 %v144
    %v158 = vpop.f32.mrf.mxu0
    %v159 = vadd.f32 %v135, %v158
    %v160 = vpop.f32.mrf.mxu0
    %v161 = vadd.f32 %v136, %v160
    %162 = vdwg.mxu0
    %v163 = vunpack.c.l.b16 %v124
    %v164 = vunpack.c.l.b16 %v126
    %v165 = vpack.c.b16 %v164, %v163
    %166 = vrot.lane.b32.xlu0 %v165, 96
    %v167 = vpop.permute.xlu0 %166
    %v169 = vsel %vm142, %v165, 0
    %v172 = vsel %vm142, %v167, 0
    %174 = vmatpush.bf16.xpose.msra.mxu0 0
    %175 = vmatpush.bf16.xpose.msra.mxu0 0
    %176 = vmatpush.bf16.xpose.msra.mxu0 0
    %177 = vmatpush.bf16.xpose.msra.mxu0 0
    %178 = vmatpush.bf16.xpose.msra.mxu0 0
    %179 = vmatpush.bf16.xpose.msra.mxu0 0
    %180 = vmatpush.bf16.xpose.msra.mxu0 0
    %181 = vmatpush.bf16.xpose.msra.mxu0 %v172
    %182 = vmatmul.bf16.gmra.mxu0 %v169
    %v183 = vpop.f32.mrf.mxu0
    %v184 = vadd.f32 %v135, %v183
    %v185 = vpop.f32.mrf.mxu0
    %v186 = vadd.f32 %v136, %v185
    %187 = vdwg.mxu0
    %v188 = vunpack.c.l.b16 %v128
    %v189 = vunpack.c.l.b16 %v130
    %v190 = vpack.c.b16 %v189, %v188
    %191 = vrot.lane.b32.xlu0 %v190, 96
    %v192 = vpop.permute.xlu0 %191
    %v194 = vsel %vm142, %v190, 0
    %v197 = vsel %vm142, %v192, 0
    %199 = vmatpush.bf16.xpose.msra.mxu0 0
    %200 = vmatpush.bf16.xpose.msra.mxu0 0
    %201 = vmatpush.bf16.xpose.msra.mxu0 0
    %202 = vmatpush.bf16.xpose.msra.mxu0 0
    %203 = vmatpush.bf16.xpose.msra.mxu0 0
    %204 = vmatpush.bf16.xpose.msra.mxu0 0
    %205 = vmatpush.bf16.xpose.msra.mxu0 0
    %206 = vmatpush.bf16.xpose.msra.mxu0 %v197
    %207 = vmatmul.bf16.gmra.mxu0 %v194
    %v208 = vpop.f32.mrf.mxu0
    %v209 = vadd.f32 %v135, %v208
    %v210 = vpop.f32.mrf.mxu0
    %v211 = vadd.f32 %v136, %v210
    %212 = vdwg.mxu0
    %v213 = vunpack.c.l.b16 %v132
    %v214 = vunpack.c.l.b16 %v134
    %v215 = vpack.c.b16 %v214, %v213
    %216 = vrot.lane.b32.xlu0 %v215, 96
    %v217 = vpop.permute.xlu0 %216
    %v219 = vsel %vm142, %v215, 0
    %v222 = vsel %vm142, %v217, 0
    %224 = vmatpush.bf16.xpose.msra.mxu0 0
    %225 = vmatpush.bf16.xpose.msra.mxu0 0
    %226 = vmatpush.bf16.xpose.msra.mxu0 0
    %227 = vmatpush.bf16.xpose.msra.mxu0 0
    %228 = vmatpush.bf16.xpose.msra.mxu0 0
    %229 = vmatpush.bf16.xpose.msra.mxu0 0
    %230 = vmatpush.bf16.xpose.msra.mxu0 0
    %231 = vmatpush.bf16.xpose.msra.mxu0 %v222
    %232 = vmatmul.bf16.gmra.mxu0 %v219
    %v233 = vpop.f32.mrf.mxu0
    %v234 = vadd.f32 %v135, %v233
    %v235 = vpop.f32.mrf.mxu0
    %v236 = vadd.f32 %v136, %v235
    %237 = vdwg.mxu0
    %vm238 = vcmask 130048
    %v239 = vsel %vm238, %v159, -inf
    %240 = vmax.xlane.f32.xlu0 %v239
    %v241 = vpop.xlane.xlu0 %240
    %v242 = vsel %vm238, %v161, -inf
    %243 = vmax.xlane.f32.xlu0 %v242
    %v244 = vpop.xlane.xlu0 %243
    %v245 = vsel %vm238, %v184, -inf
    %246 = vmax.xlane.f32.xlu0 %v245
    %v247 = vpop.xlane.xlu0 %246
    %v248 = vsel %vm238, %v186, -inf
    %249 = vmax.xlane.f32.xlu0 %v248
    %v250 = vpop.xlane.xlu0 %249
    %v251 = vsel %vm238, %v209, -inf
    %252 = vmax.xlane.f32.xlu0 %v251
    %v253 = vpop.xlane.xlu0 %252
    %v254 = vsel %vm238, %v211, -inf
    %255 = vmax.xlane.f32.xlu0 %v254
    %v256 = vpop.xlane.xlu0 %255
    %v257 = vsel %vm238, %v234, -inf
    %258 = vmax.xlane.f32.xlu0 %v257
    %v259 = vpop.xlane.xlu0 %258
    %v260 = vsel %vm238, %v236, -inf
    %261 = vmax.xlane.f32.xlu0 %v260
    %v262 = vpop.xlane.xlu0 %261
    %v263 = vsub.f32 %v159, %v241
    %v264 = vsub.f32 %v161, %v244
    %v265 = vsub.f32 %v184, %v247
    %v266 = vsub.f32 %v186, %v250
    %v267 = vsub.f32 %v209, %v253
    %v268 = vsub.f32 %v211, %v256
    %v269 = vsub.f32 %v234, %v259
    %v270 = vsub.f32 %v236, %v262
    %v271 = vmul.f32 %v263, 1.442695
    %v272 = vpow.pop %v271
    %v273 = vmul.f32 %v264, 1.442695
    %v274 = vpow.pop %v273
    %v275 = vmul.f32 %v265, 1.442695
    %v276 = vpow.pop %v275
    %v277 = vmul.f32 %v266, 1.442695
    %v278 = vpow.pop %v277
    %v279 = vmul.f32 %v267, 1.442695
    %v280 = vpow.pop %v279
    %v281 = vmul.f32 %v268, 1.442695
    %v282 = vpow.pop %v281
    %v283 = vmul.f32 %v269, 1.442695
    %v284 = vpow.pop %v283
    %v285 = vmul.f32 %v270, 1.442695
    %v286 = vpow.pop %v285
    %v287 = vsel %vm238, %v272, 0.0
    %288 = vadd.xlane.f32.xlu0 %v287
    %v289 = vpop.xlane.xlu0 %288
    %v290 = vsel %vm238, %v274, 0.0
    %291 = vadd.xlane.f32.xlu0 %v290
    %v292 = vpop.xlane.xlu0 %291
    %v293 = vsel %vm238, %v276, 0.0
    %294 = vadd.xlane.f32.xlu0 %v293
    %v295 = vpop.xlane.xlu0 %294
    %v296 = vsel %vm238, %v278, 0.0
    %297 = vadd.xlane.f32.xlu0 %v296
    %v298 = vpop.xlane.xlu0 %297
    %v299 = vsel %vm238, %v280, 0.0
    %300 = vadd.xlane.f32.xlu0 %v299
    %v301 = vpop.xlane.xlu0 %300
    %v302 = vsel %vm238, %v282, 0.0
    %303 = vadd.xlane.f32.xlu0 %v302
    %v304 = vpop.xlane.xlu0 %303
    %v305 = vsel %vm238, %v284, 0.0
    %306 = vadd.xlane.f32.xlu0 %v305
    %v307 = vpop.xlane.xlu0 %306
    %v308 = vsel %vm238, %v286, 0.0
    %309 = vadd.xlane.f32.xlu0 %v308
    %v310 = vpop.xlane.xlu0 %309
    %v311 = vrcp.pop %v289
    %v312 = vrcp.pop %v292
    %v313 = vrcp.pop %v295
    %v314 = vrcp.pop %v298
    %v315 = vrcp.pop %v301
    %v316 = vrcp.pop %v304
    %v317 = vrcp.pop %v307
    %v318 = vrcp.pop %v310
    %v319 = vmul.f32 %v272, %v311
    %v320 = vmul.f32 %v274, %v312
    %v321 = vmul.f32 %v276, %v313
    %v322 = vmul.f32 %v278, %v314
    %v323 = vmul.f32 %v280, %v315
    %v324 = vmul.f32 %v282, %v316
    %v325 = vmul.f32 %v284, %v317
    %v326 = vmul.f32 %v286, %v318
    %v327 = vpack.c.bf16 %v319, %v319
    %v328 = vpack.c.bf16 %v320, %v320
    %v329 = vpack.c.bf16 %v321, %v321
    %v330 = vpack.c.bf16 %v322, %v322
    %v331 = vpack.c.bf16 %v323, %v323
    %v332 = vpack.c.bf16 %v324, %v324
    %v333 = vpack.c.bf16 %v325, %v325
    %v334 = vpack.c.bf16 %v326, %v326
    %v337 = vunpack.c.l.b16 %v327
    %v338 = vunpack.c.l.b16 %v328
    %v339 = vpack.c.b16 %v338, %v337
    %340 = vrot.lane.b32.xlu0 %v139, 64
    %v341 = vpop.permute.xlu0 %340
    %v344 = vsel %vm238, %v339, 0
    %346 = vmatpush.bf16.msra.mxu0 0
    %347 = vmatpush.bf16.msra.mxu0 0
    %348 = vmatpush.bf16.msra.mxu0 0
    %349 = vmatpush.bf16.msra.mxu0 0
    %350 = vmatpush.bf16.msra.mxu0 0
    %351 = vmatpush.bf16.msra.mxu0 0
    %352 = vmatpush.bf16.msra.mxu0 0
    %353 = vmatpush.bf16.msra.mxu0 %v341
    %354 = vmatmul.bf16.gmra.mxu0 %v344
    %v355 = vpop.f32.mrf.mxu0
    %v356 = vadd.f32 0.0, %v355
    %v357 = vpop.f32.mrf.mxu0
    %v358 = vadd.f32 0.0, %v357
    %359 = vdwg.mxu0
    %v362 = vunpack.c.l.b16 %v329
    %v363 = vunpack.c.l.b16 %v330
    %v364 = vpack.c.b16 %v363, %v362
    %365 = vrot.lane.b32.xlu0 %v165, 64
    %v366 = vpop.permute.xlu0 %365
    %v369 = vsel %vm238, %v364, 0
    %371 = vmatpush.bf16.msra.mxu0 0
    %372 = vmatpush.bf16.msra.mxu0 0
    %373 = vmatpush.bf16.msra.mxu0 0
    %374 = vmatpush.bf16.msra.mxu0 0
    %375 = vmatpush.bf16.msra.mxu0 0
    %376 = vmatpush.bf16.msra.mxu0 0
    %377 = vmatpush.bf16.msra.mxu0 0
    %378 = vmatpush.bf16.msra.mxu0 %v366
    %379 = vmatmul.bf16.gmra.mxu0 %v369
    %v380 = vpop.f32.mrf.mxu0
    %v381 = vadd.f32 0.0, %v380
    %v382 = vpop.f32.mrf.mxu0
    %v383 = vadd.f32 0.0, %v382
    %384 = vdwg.mxu0
    %v387 = vunpack.c.l.b16 %v331
    %v388 = vunpack.c.l.b16 %v332
    %v389 = vpack.c.b16 %v388, %v387
    %390 = vrot.lane.b32.xlu0 %v190, 64
    %v391 = vpop.permute.xlu0 %390
    %v394 = vsel %vm238, %v389, 0
    %396 = vmatpush.bf16.msra.mxu0 0
    %397 = vmatpush.bf16.msra.mxu0 0
    %398 = vmatpush.bf16.msra.mxu0 0
    %399 = vmatpush.bf16.msra.mxu0 0
    %400 = vmatpush.bf16.msra.mxu0 0
    %401 = vmatpush.bf16.msra.mxu0 0
    %402 = vmatpush.bf16.msra.mxu0 0
    %403 = vmatpush.bf16.msra.mxu0 %v391
    %404 = vmatmul.bf16.gmra.mxu0 %v394
    %v405 = vpop.f32.mrf.mxu0
    %v406 = vadd.f32 0.0, %v405
    %v407 = vpop.f32.mrf.mxu0
    %v408 = vadd.f32 0.0, %v407
    %409 = vdwg.mxu0
    %v412 = vunpack.c.l.b16 %v333
    %v413 = vunpack.c.l.b16 %v334
    %v414 = vpack.c.b16 %v413, %v412
    %415 = vrot.lane.b32.xlu0 %v215, 64
    %v416 = vpop.permute.xlu0 %415
    %v419 = vsel %vm238, %v414, 0
    %421 = vmatpush.bf16.msra.mxu0 0
    %422 = vmatpush.bf16.msra.mxu0 0
    %423 = vmatpush.bf16.msra.mxu0 0
    %424 = vmatpush.bf16.msra.mxu0 0
    %425 = vmatpush.bf16.msra.mxu0 0
    %426 = vmatpush.bf16.msra.mxu0 0
    %427 = vmatpush.bf16.msra.mxu0 0
    %428 = vmatpush.bf16.msra.mxu0 %v416
    %429 = vmatmul.bf16.gmra.mxu0 %v419
    %v430 = vpop.f32.mrf.mxu0
    %v431 = vadd.f32 0.0, %v430
    %v432 = vpop.f32.mrf.mxu0
    %v433 = vadd.f32 0.0, %v432
    %434 = vdwg.mxu0
    %437 = vrot.lane.b32.xlu0 %v381, 8
    %v438 = vpop.permute.xlu0 %437
    %439 = vrot.lane.b32.xlu0 %v383, 8
    %v440 = vpop.permute.xlu0 %439
    %445 = vrot.lane.b32.xlu0 %v406, 16
    %v446 = vpop.permute.xlu0 %445
    %447 = vrot.lane.b32.xlu0 %v408, 16
    %v448 = vpop.permute.xlu0 %447
    %453 = vrot.lane.b32.xlu0 %v431, 24
    %v454 = vpop.permute.xlu0 %453
    %455 = vrot.lane.b32.xlu0 %v433, 24
    %v456 = vpop.permute.xlu0 %455
    %v459 = vsel %vm142, %v356, %v438
    %v460 = vsel %vm142, %v358, %v440
    %v461 = vsel %vm238, %v459, %v446
    %v462 = vsel %vm238, %v460, %v448
    %vm463 = vcmask 195584
    %v464 = vsel %vm463, %v461, %v454
    %v465 = vsel %vm463, %v462, %v456
    %v466 = vpack.c.bf16 %v465, %v464
    %v467 = vld [vmem:[#allocation2] sm:$0xf]
    %v468 = vld [vmem:[#allocation2 + $0x4] sm:$0xf]
    %v469 = vld [vmem:[#allocation2 + $0x8] sm:$0xf]
    %v470 = vld [vmem:[#allocation2 + $0xc] sm:$0xf]
    %v471 = vperm.slane %v77, 0
    %v476 = vunpack.c.l.b16 %v467
    %v477 = vunpack.c.l.b16 %v468
    %v478 = vunpack.c.l.b16 %v469
    %v479 = vunpack.c.l.b16 %v470
    %v480 = vpack.c.b16 %v477, %v476
    %v481 = vpack.c.b16 %v479, %v478
    %v485 = vsel %vm101, %v466, 0
    %487 = vmatpush.bf16.msra.mxu0 0
    %488 = vmatpush.bf16.msra.mxu0 0
    %489 = vmatpush.bf16.msra.mxu0 0
    %490 = vmatpush.bf16.msra.mxu0 0
    %491 = vmatpush.bf16.msra.mxu0 0
    %492 = vmatpush.bf16.msra.mxu0 0
    %493 = vmatpush.bf16.msra.mxu0 %v481
    %494 = vmatpush.bf16.msra.mxu0 %v480
    %495 = vmatmul.bf16.gmra.mxu0 %v485
    %v496 = vpop.f32.mrf.mxu0
    %v497 = vadd.f32 %v471, %v496
    %v498 = vpop.f32.mrf.mxu0
    %v499 = vadd.f32 %v471, %v498
    %500 = vdwg.mxu0
    %v501 = vadd.f32 %v73, %v497
    %v502 = vadd.f32 %v74, %v499
    %v503 = vsel %vm101, %v501, 0.0
    %504 = vadd.xlane.f32.xlu0 %v503
    %v505 = vpop.xlane.xlu0 %504
    %v506 = vsel %vm101, %v502, 0.0
    %507 = vadd.xlane.f32.xlu0 %v506
    %v508 = vpop.xlane.xlu0 %507
    %v509 = vrcp.pop 32.0
    %v510 = vmul.f32 32.0, %v509
    %v511 = vsub.f32 1.0, %v510
    %v512 = vmul.f32 %v509, %v511
    %v513 = vadd.f32 %v509, %v512
    %vm514 = vweird.f32 %v509
    %v515 = vsel %vm514, %v509, %v513
    %v516 = vmul.f32 %v505, %v515
    %v517 = vmul.f32 %v508, %v515
    %v518 = vsub.f32 %v501, %v516
    %v519 = vsub.f32 %v502, %v517
    %v520 = vmul.f32 %v518, %v518
    %v521 = vmul.f32 %v519, %v519
    %v522 = vsel %vm101, %v520, 0.0
    %523 = vadd.xlane.f32.xlu0 %v522
    %v524 = vpop.xlane.xlu0 %523
    %v525 = vsel %vm101, %v521, 0.0
    %526 = vadd.xlane.f32.xlu0 %v525
    %v527 = vpop.xlane.xlu0 %526
    %v528 = vmul.f32 %v524, %v515
    %v529 = vmul.f32 %v527, %v515
    %v530 = vadd.f32 %v528, 1e-06
    %v531 = vadd.f32 %v529, 1e-06
    %v532 = vrsqrt.pop %v530
    %v533 = vmul.f32 %v532, %v530
    %v534 = vmul.f32 %v533, %v532
    %v535 = vmul.f32 0.5, %v534
    %v536 = vsub.f32 1.5, %v535
    %v537 = vmul.f32 %v532, %v536
    %vm538 = vweird.f32 %v530
    %vm539 = vweird.f32 %v532
    %vm540 = vmor %vm538, %vm539
    %v541 = vsel %vm540, %v532, %v537
    %v542 = vrsqrt.pop %v531
    %v543 = vmul.f32 %v542, %v531
    %v544 = vmul.f32 %v543, %v542
    %v545 = vmul.f32 0.5, %v544
    %v546 = vsub.f32 1.5, %v545
    %v547 = vmul.f32 %v542, %v546
    %vm548 = vweird.f32 %v531
    %vm549 = vweird.f32 %v542
    %vm550 = vmor %vm548, %vm549
    %v551 = vsel %vm550, %v542, %v547
    %v552 = vmul.f32 %v518, %v541
    %v553 = vmul.f32 %v519, %v551
    %v554 = vperm.slane %v78, 0
    %v555 = vmul.f32 %v552, %v554
    %v556 = vmul.f32 %v553, %v554
    %v557 = vperm.slane %v79, 0
    %v558 = vadd.f32 %v555, %v557
    %v559 = vadd.f32 %v556, %v557
    %v560 = vpack.c.bf16 %v559, %v558
    %v561 = vld [vmem:[#allocation5] sm:$0xf]
    %v562 = vld [vmem:[#allocation5 + $0x4] sm:$0xf]
    %v563 = vld [vmem:[#allocation5 + $0x8] sm:$0xf]
    %v564 = vld [vmem:[#allocation5 + $0xc] sm:$0xf]
    %v565 = vperm.slane %v80, 0
    %v570 = vunpack.c.l.b16 %v561
    %v571 = vunpack.c.l.b16 %v562
    %v572 = vunpack.c.l.b16 %v563
    %v573 = vunpack.c.l.b16 %v564
    %v574 = vpack.c.b16 %v571, %v570
    %v575 = vpack.c.b16 %v573, %v572
    %v579 = vsel %vm101, %v560, 0
    %581 = vmatpush.bf16.msra.mxu0 0
    %582 = vmatpush.bf16.msra.mxu0 0
    %583 = vmatpush.bf16.msra.mxu0 0
    %584 = vmatpush.bf16.msra.mxu0 0
    %585 = vmatpush.bf16.msra.mxu0 0
    %586 = vmatpush.bf16.msra.mxu0 0
    %587 = vmatpush.bf16.msra.mxu0 %v575
    %588 = vmatpush.bf16.msra.mxu0 %v574
    %589 = vmatmul.bf16.gmra.mxu0 %v579
    %v590 = vpop.f32.mrf.mxu0
    %v591 = vadd.f32 %v565, %v590
    %v592 = vpop.f32.mrf.mxu0
    %v593 = vadd.f32 %v565, %v592
    %594 = vdwg.mxu0
    %v595 = vmax.f32 %v591, 0.0
    %v596 = vmax.f32 %v593, 0.0
    %v597 = vpack.c.bf16 %v596, %v595
    %v598 = vld [vmem:[%s5] sm:$0xf]
    %v599 = vld [vmem:[%s5 + $0x4] sm:$0xf]
    %v600 = vld [vmem:[%s5 + $0x8] sm:$0xf]
    %v601 = vld [vmem:[%s5 + $0xc] sm:$0xf]
    %v602 = vld [vmem:[%s5 + $0x10] sm:$0xf]
    %v603 = vld [vmem:[%s5 + $0x14] sm:$0xf]
    %v604 = vld [vmem:[%s5 + $0x18] sm:$0xf]
    %v605 = vld [vmem:[%s5 + $0x1c] sm:$0xf]
    %v606 = vperm.slane %v81, 0
    %v615 = vunpack.c.l.b16 %v598
    %v616 = vunpack.c.l.b16 %v599
    %v617 = vunpack.c.l.b16 %v600
    %v618 = vunpack.c.l.b16 %v601
    %v619 = vunpack.c.l.b16 %v602
    %v620 = vunpack.c.l.b16 %v603
    %v621 = vunpack.c.l.b16 %v604
    %v622 = vunpack.c.l.b16 %v605
    %v623 = vpack.c.b16 %v616, %v615
    %v624 = vpack.c.b16 %v618, %v617
    %v625 = vpack.c.b16 %v620, %v619
    %v626 = vpack.c.b16 %v622, %v621
    %vm631 = vcmask 523264
    %v633 = vsel %vm631, %v597, 0
    %635 = vmatpush.bf16.msra.mxu0 0
    %636 = vmatpush.bf16.msra.mxu0 0
    %637 = vmatpush.bf16.msra.mxu0 0
    %638 = vmatpush.bf16.msra.mxu0 0
    %639 = vmatpush.bf16.msra.mxu0 %v626
    %640 = vmatpush.bf16.msra.mxu0 %v625
    %641 = vmatpush.bf16.msra.mxu0 %v624
    %642 = vmatpush.bf16.msra.mxu0 %v623
    %643 = vmatmul.bf16.gmra.mxu0 %v633
    %v644 = vpop.f32.mrf.mxu0
    %v645 = vadd.f32 %v606, %v644
    %v646 = vpop.f32.mrf.mxu0
    %v647 = vadd.f32 %v606, %v646
    %648 = vdwg.mxu0
    %v649 = vadd.f32 %v558, %v645
    %v650 = vadd.f32 %v559, %v647
    %v651 = vsel %vm101, %v649, 0.0
    %652 = vadd.xlane.f32.xlu0 %v651
    %v653 = vpop.xlane.xlu0 %652
    %v654 = vsel %vm101, %v650, 0.0
    %655 = vadd.xlane.f32.xlu0 %v654
    %v656 = vpop.xlane.xlu0 %655
    %v657 = vmul.f32 %v653, %v515
    %v658 = vmul.f32 %v656, %v515
    %v659 = vsub.f32 %v649, %v657
    %v660 = vsub.f32 %v650, %v658
    %v661 = vmul.f32 %v659, %v659
    %v662 = vmul.f32 %v660, %v660
    %v663 = vsel %vm101, %v661, 0.0
    %664 = vadd.xlane.f32.xlu0 %v663
    %v665 = vpop.xlane.xlu0 %664
    %v666 = vsel %vm101, %v662, 0.0
    %667 = vadd.xlane.f32.xlu0 %v666
    %v668 = vpop.xlane.xlu0 %667
    %v669 = vmul.f32 %v665, %v515
    %v670 = vmul.f32 %v668, %v515
    %v671 = vadd.f32 %v669, 1e-06
    %v672 = vadd.f32 %v670, 1e-06
    %v673 = vrsqrt.pop %v671
    %v674 = vmul.f32 %v673, %v671
    %v675 = vmul.f32 %v674, %v673
    %v676 = vmul.f32 0.5, %v675
    %v677 = vsub.f32 1.5, %v676
    %v678 = vmul.f32 %v673, %v677
    %vm679 = vweird.f32 %v671
    %vm680 = vweird.f32 %v673
    %vm681 = vmor %vm679, %vm680
    %v682 = vsel %vm681, %v673, %v678
    %v683 = vrsqrt.pop %v672
    %v684 = vmul.f32 %v683, %v672
    %v685 = vmul.f32 %v684, %v683
    %v686 = vmul.f32 0.5, %v685
    %v687 = vsub.f32 1.5, %v686
    %v688 = vmul.f32 %v683, %v687
    %vm689 = vweird.f32 %v672
    %vm690 = vweird.f32 %v683
    %vm691 = vmor %vm689, %vm690
    %v692 = vsel %vm691, %v683, %v688
    %v693 = vmul.f32 %v659, %v682
    %v694 = vmul.f32 %v660, %v692
    %v695 = vperm.slane %v82, 0
    %v696 = vmul.f32 %v693, %v695
    %v697 = vmul.f32 %v694, %v695
    %v698 = vperm.slane %v83, 0
    %v699 = vadd.f32 %v696, %v698
    %v700 = vadd.f32 %v697, %v698
    %v702 = vrot.slane %v699, 4
    %703 = vrot.lane.b32.xlu0 %v702, 32
    %v704 = vpop.permute.xlu0 %703
    %707 = vrot.lane.b32.xlu0 %v700, 64
    %v708 = vpop.permute.xlu0 %707
    %v710 = vrot.slane %v700, 4
    %711 = vrot.lane.b32.xlu0 %v710, 96
    %v712 = vpop.permute.xlu0 %711
    %v714 = vsel %vm101, %v699, %v704
    %v715 = vsel %vm631, %v714, %v708
    %vm716 = vcmask 785408
    %v717 = vsel %vm716, %v715, %v712
    %718 = vst [vmem:[#allocation8] sm:$0xf] %v717
    // Predicated region
    $region42: #{tpu_custom_call.1} parent=1 // pred_check
      _
    $region43: #{tpu_custom_call.1} parent=1 // pred_check_branch
      %720 = sbr.rel (0) target = $region45
    $region44: #{tpu_custom_call.1} parent=1 // pred_region
      %722 = vsyncadd [#allocation4], 0
      %s724 = sshll.u32 [#allocation8], 4
      %s725 = int_to_ptr.vmem [resolvable:$true] %s724
      %s726 = sshll.u32 %s7, 4
      %s727 = int_to_ptr.hbm [resolvable:$true] %s726
      %729 = dma.vmem_to_hbm [thread:$0]  %s725, 64, %s727, [#allocation4]
    $region45: #{tpu_custom_call.1} parent=1 // pred_fallthru
      _
    // Predicated region
    $region46: #{tpu_custom_call.1} parent=1 // pred_check
      _
    $region47: #{tpu_custom_call.1} parent=1 // pred_check_branch
      %731 = sbr.rel (0) target = $region49
    $region48: #{tpu_custom_call.1} parent=1 // pred_region
      %733 = dma.done [#allocation4], 64
    $region49: #{tpu_custom_call.1} parent=1 // pred_fallthru
      _
    %734 = vsyncpa [#allocation3], 1
    %735 = vsyncpa [#allocation6], 1
    %736 = vsyncpa [#allocation4], 1

</llo_original>
